<compile_context>
chip_gen: v7x
topology: tpu7x:2x2x1
jax: 0.10.0
libtpu: 0.0.40
codegen_flags: <defaults>
</compile_context>

<pallas_src>
import jax
import jax.numpy as jnp
from jax.experimental import pallas as pl
from jax.experimental.pallas import tpu as pltpu

LANE = 128  # TPU lane width; weight/bias feature dims padded to this.


def _round_up(n, m):
    return ((n + m - 1) // m) * m


def _make_mlp_kernel(in_dim):
    """Kernel factory: `in_dim` is the true (unpadded) input feature width."""

    def mlp_kernel(x_ref, w_ref, b_ref, o_ref):
        # x_ref: [TB, in_dim] bf16   (batch tile, pipelined over the grid)
        # w_ref: [4, 128, 128] bf16  (all four layer weights, VMEM-resident)
        # b_ref: [4, 128]      f32   (all four biases,        VMEM-resident)
        # o_ref: [TB, 128]     f32   (lane-dense output tile)
        h = x_ref[...]                                        # bf16
        # Layer 1: contract over the true in_dim (static slice of padded w).
        w0 = w_ref[0][:in_dim, :]
        acc = jnp.dot(h, w0, preferred_element_type=jnp.float32)
        acc = jnp.maximum(acc + b_ref[0:1, :], 0.0)           # f32 bias+ReLU (VPU)
        h = acc.astype(jnp.bfloat16)                          # bf16 only at MXU inputs
        # Layers 2 and 3 (unrolled at trace time).
        for layer in (1, 2):
            acc = jnp.dot(h, w_ref[layer], preferred_element_type=jnp.float32)
            acc = jnp.maximum(acc + b_ref[layer:layer + 1, :], 0.0)
            h = acc.astype(jnp.bfloat16)
        # Layer 4 (no ReLU): full 128-lane unmasked f32 store.
        acc = jnp.dot(h, w_ref[3], preferred_element_type=jnp.float32)
        o_ref[...] = acc + b_ref[3:4, :]

    return mlp_kernel


def pack_params(params):
    """Pad every layer to 128 lanes and pack. Call ONCE at init, not per forward."""
    ws, bs = [], []
    for i in range(1, 5):
        w = params[f"w{i}"]   # [in, out]
        b = params[f"b{i}"]   # [1, out]
        assert w.shape[0] <= LANE and w.shape[1] <= LANE, (
            "this kernel assumes all feature dims <= 128; tile K/N otherwise")
        w = jnp.pad(w, ((0, LANE - w.shape[0]), (0, LANE - w.shape[1])))
        b = jnp.pad(b, ((0, 0), (0, LANE - b.shape[1])))
        ws.append(w.astype(jnp.bfloat16))
        bs.append(b.astype(jnp.float32))
    return jnp.stack(ws, axis=0), jnp.concatenate(bs, axis=0)


def _choose_batch_tile(B, cap):
    """Rows per grid step: multiple of 16 (bf16 sublane packing), <= cap, and
    >= 2 grid steps for mid/large batches so v7x's 2 TensorCores both run."""
    cap = max(16, (cap // 16) * 16)
    full = _round_up(B, 16)
    if full <= cap:
        if B > 64:                      # enough work: split into >=2 grid steps
            return _round_up((full + 1) // 2, 16)
        return full                     # tiny batch: one small tile
    return cap


def mlp_forward(x, w_packed, b_packed, *, num_class, tile_batch=512):
    """x: [B, in_dim] float.  w_packed: [4,128,128] bf16 and b_packed: [4,128]
    f32 from pack_params (packed once, outside the per-call path).
    Returns [B, num_class] f32."""
    B, in_dim = x.shape

    tb = _choose_batch_tile(B, tile_batch)
    bp = _round_up(B, tb)

    # bf16 x in HBM (kernel used bf16 at the MXU input anyway); feature dim
    # left UNPADDED -> minimal x read stream for this mem-bound kernel.
    x_bf = x.astype(jnp.bfloat16)
    if bp > B:
        x_bf = jnp.pad(x_bf, ((0, bp - B), (0, 0)))

    # Advisory cost estimate (padded hidden dims; values are scheduler hints).
    flops = 2 * B * (in_dim * LANE + 3 * LANE * LANE)
    bytes_accessed = (B * in_dim * 2 + w_packed.size * 2 + b_packed.size * 4
                      + B * LANE * 4)

    out = pl.pallas_call(
        _make_mlp_kernel(in_dim),
        out_shape=jax.ShapeDtypeStruct((bp, LANE), jnp.float32),
        grid=(bp // tb,),
        in_specs=[
            # x: batch-tiled; last dim equals the full array dim (valid block).
            pl.BlockSpec((tb, in_dim), lambda i: (i, 0)),
            # weights/biases: constant index_map -> stay resident in VMEM.
            pl.BlockSpec((4, LANE, LANE), lambda i: (0, 0, 0)),
            pl.BlockSpec((4, LANE), lambda i: (0, 0)),
        ],
        out_specs=pl.BlockSpec((tb, LANE), lambda i: (i, 0)),
        compiler_params=pltpu.CompilerParams(
            dimension_semantics=("parallel",)),
        cost_estimate=pl.CostEstimate(
            flops=flops, transcendentals=0, bytes_accessed=bytes_accessed),
    )(x_bf, w_packed, b_packed)

    return out[:B, :num_class]


def init_params(key, input_size, h1, h2, h3, num_class):
    """Deterministic PyTorch-style (Kaiming-uniform) init for nn.Linear."""
    dims = [(input_size, h1), (h1, h2), (h2, h3), (h3, num_class)]
    params = {}
    for idx, (fan_in, fan_out) in enumerate(dims, start=1):
        key, kw, kb = jax.random.split(key, 3)
        bound = 1.0 / jnp.sqrt(jnp.float32(fan_in))
        # stored as [in, out] (transpose of PyTorch's [out, in])
        params[f"w{idx}"] = jax.random.uniform(
            kw, (fan_in, fan_out), jnp.float32, minval=-bound, maxval=bound)
        params[f"b{idx}"] = jax.random.uniform(
            kb, (1, fan_out), jnp.float32, minval=-bound, maxval=bound)
    return params


def mlp_reference_bf16(x, params):
    """Mirrors the kernel numerics: bf16 dot operands, f32 accumulation."""
    h = x
    for i in range(1, 5):
        w = params[f"w{i}"].astype(jnp.bfloat16)
        h = jnp.dot(h.astype(jnp.bfloat16), w,
                    preferred_element_type=jnp.float32) + params[f"b{i}"]
        if i < 4:
            h = jnp.maximum(h, 0.0)
    return h


def mlp_reference_f32(x, params):
    h = x
    for i in range(1, 4):
        h = jnp.maximum(h @ params[f"w{i}"] + params[f"b{i}"], 0.0)
    return h @ params["w4"] + params["b4"]


if __name__ == "__main__":
    key = jax.random.PRNGKey(0)
    input_size, h1, h2, h3, num_class = 32, 64, 64, 32, 16

    key, kp = jax.random.split(key)
    params = init_params(kp, input_size, h1, h2, h3, num_class)
    w_packed, b_packed = pack_params(params)          # packed ONCE (hoisted)

    fwd = jax.jit(mlp_forward, static_argnames=("num_class", "tile_batch"))

    # Exercise both the tiny single-tile path and the multi-step (>=2 grid
    # steps, batch-padded) path.
    for B in (8, 200):
        key, kx = jax.random.split(key)
        x = jax.random.normal(kx, (B, input_size), jnp.float32)

        out = jax.block_until_ready(
            fwd(x, w_packed, b_packed, num_class=num_class))

        assert out.shape == (B, num_class)
        # Tight check vs a reference with identical (bf16-operand) numerics.
        ref_bf16 = mlp_reference_bf16(x, params)
        assert jnp.allclose(out, ref_bf16, atol=1e-3, rtol=1e-3), (
            f"mismatch vs bf16 ref at B={B}")
        # Loose sanity check vs the pure-f32 reference (bf16 operand rounding).
        ref_f32 = mlp_reference_f32(x, params)
        assert jnp.allclose(out, ref_f32, atol=5e-2, rtol=5e-2), (
            f"mismatch vs f32 ref at B={B}")

    print("KERNEL_OK")
</pallas_src>

<mosaic_0001>
module attributes {stable_mosaic.version = 11 : i64} {
  func.func @mlp_kernel(%arg0: i32, %arg1: memref<16x32xbf16, #tpu.memory_space<vmem>>, %arg2: memref<4x128x128xbf16, #tpu.memory_space<vmem>>, %arg3: memref<4x128xf32, #tpu.memory_space<vmem>>, %arg4: memref<16x128xf32, #tpu.memory_space<vmem>>) attributes {dimension_semantics = [#tpu.dimension_semantics<parallel>], iteration_bounds = array<i64: 1>, scalar_prefetch = 0 : i64, scratch_operands = 0 : i64, tpu.core_type = #tpu.core_type<tc>, window_params = [{transform_indices = @transform_0, window_bounds = array<i64: 16, 32>}, {pipeline_mode = #tpu.pipeline_mode<synchronous>, transform_indices = @transform_1, window_bounds = array<i64: 4, 128, 128>}, {pipeline_mode = #tpu.pipeline_mode<synchronous>, transform_indices = @transform_2, window_bounds = array<i64: 4, 128>}, {transform_indices = @transform_3, window_bounds = array<i64: 16, 128>}]} {
    %c0 = arith.constant 0 : index
    %c0_0 = arith.constant 0 : index
    %0 = vector.load %arg1[%c0, %c0_0] : memref<16x32xbf16, #tpu.memory_space<vmem>>, vector<16x32xbf16>
    %c0_1 = arith.constant 0 : index
    %c0_2 = arith.constant 0 : index
    %c0_3 = arith.constant 0 : index
    %1 = vector.load %arg2[%c0_1, %c0_2, %c0_3] : memref<4x128x128xbf16, #tpu.memory_space<vmem>>, vector<1x128x128xbf16>
    %2 = vector.shape_cast %1 : vector<1x128x128xbf16> to vector<128x128xbf16>
    %3 = vector.extract_strided_slice %2 {offsets = [0, 0], sizes = [32, 128], strides = [1, 1]} : vector<128x128xbf16> to vector<32x128xbf16>
    %cst = arith.constant dense<0.000000e+00> : vector<16x128xf32>
    %4 = tpu.matmul %0, %3, %cst {dimension_numbers = #tpu.dot_dimension_numbers<[1], [0], [0], [1], [0, 0, 1, 1], [], []>} : vector<16x32xbf16>, vector<32x128xbf16>, vector<16x128xf32> -> vector<16x128xf32>
    %c0_4 = arith.constant 0 : index
    %c0_5 = arith.constant 0 : index
    %5 = vector.load %arg3[%c0_4, %c0_5] : memref<4x128xf32, #tpu.memory_space<vmem>>, vector<1x128xf32>
    %6 = vector.broadcast %5 : vector<1x128xf32> to vector<16x128xf32>
    %7 = arith.addf %4, %6 : vector<16x128xf32>
    %cst_6 = arith.constant 0.000000e+00 : f32
    %8 = vector.broadcast %cst_6 : f32 to vector<16x128xf32>
    %9 = arith.maximumf %7, %8 : vector<16x128xf32>
    %10 = arith.truncf %9 : vector<16x128xf32> to vector<16x128xbf16>
    %c1 = arith.constant 1 : index
    %c0_7 = arith.constant 0 : index
    %c0_8 = arith.constant 0 : index
    %11 = vector.load %arg2[%c1, %c0_7, %c0_8] : memref<4x128x128xbf16, #tpu.memory_space<vmem>>, vector<1x128x128xbf16>
    %12 = vector.shape_cast %11 : vector<1x128x128xbf16> to vector<128x128xbf16>
    %cst_9 = arith.constant dense<0.000000e+00> : vector<16x128xf32>
    %13 = tpu.matmul %10, %12, %cst_9 {dimension_numbers = #tpu.dot_dimension_numbers<[1], [0], [0], [1], [0, 0, 1, 1], [], []>} : vector<16x128xbf16>, vector<128x128xbf16>, vector<16x128xf32> -> vector<16x128xf32>
    %c1_10 = arith.constant 1 : index
    %c0_11 = arith.constant 0 : index
    %14 = vector.load %arg3[%c1_10, %c0_11] : memref<4x128xf32, #tpu.memory_space<vmem>>, vector<1x128xf32>
    %15 = vector.broadcast %14 : vector<1x128xf32> to vector<16x128xf32>
    %16 = arith.addf %13, %15 : vector<16x128xf32>
    %cst_12 = arith.constant 0.000000e+00 : f32
    %17 = vector.broadcast %cst_12 : f32 to vector<16x128xf32>
    %18 = arith.maximumf %16, %17 : vector<16x128xf32>
    %19 = arith.truncf %18 : vector<16x128xf32> to vector<16x128xbf16>
    %c2 = arith.constant 2 : index
    %c0_13 = arith.constant 0 : index
    %c0_14 = arith.constant 0 : index
    %20 = vector.load %arg2[%c2, %c0_13, %c0_14] : memref<4x128x128xbf16, #tpu.memory_space<vmem>>, vector<1x128x128xbf16>
    %21 = vector.shape_cast %20 : vector<1x128x128xbf16> to vector<128x128xbf16>
    %cst_15 = arith.constant dense<0.000000e+00> : vector<16x128xf32>
    %22 = tpu.matmul %19, %21, %cst_15 {dimension_numbers = #tpu.dot_dimension_numbers<[1], [0], [0], [1], [0, 0, 1, 1], [], []>} : vector<16x128xbf16>, vector<128x128xbf16>, vector<16x128xf32> -> vector<16x128xf32>
    %c2_16 = arith.constant 2 : index
    %c0_17 = arith.constant 0 : index
    %23 = vector.load %arg3[%c2_16, %c0_17] : memref<4x128xf32, #tpu.memory_space<vmem>>, vector<1x128xf32>
    %24 = vector.broadcast %23 : vector<1x128xf32> to vector<16x128xf32>
    %25 = arith.addf %22, %24 : vector<16x128xf32>
    %cst_18 = arith.constant 0.000000e+00 : f32
    %26 = vector.broadcast %cst_18 : f32 to vector<16x128xf32>
    %27 = arith.maximumf %25, %26 : vector<16x128xf32>
    %28 = arith.truncf %27 : vector<16x128xf32> to vector<16x128xbf16>
    %c3 = arith.constant 3 : index
    %c0_19 = arith.constant 0 : index
    %c0_20 = arith.constant 0 : index
    %29 = vector.load %arg2[%c3, %c0_19, %c0_20] : memref<4x128x128xbf16, #tpu.memory_space<vmem>>, vector<1x128x128xbf16>
    %30 = vector.shape_cast %29 : vector<1x128x128xbf16> to vector<128x128xbf16>
    %cst_21 = arith.constant dense<0.000000e+00> : vector<16x128xf32>
    %31 = tpu.matmul %28, %30, %cst_21 {dimension_numbers = #tpu.dot_dimension_numbers<[1], [0], [0], [1], [0, 0, 1, 1], [], []>} : vector<16x128xbf16>, vector<128x128xbf16>, vector<16x128xf32> -> vector<16x128xf32>
    %c3_22 = arith.constant 3 : index
    %c0_23 = arith.constant 0 : index
    %32 = vector.load %arg3[%c3_22, %c0_23] : memref<4x128xf32, #tpu.memory_space<vmem>>, vector<1x128xf32>
    %33 = vector.broadcast %32 : vector<1x128xf32> to vector<16x128xf32>
    %34 = arith.addf %31, %33 : vector<16x128xf32>
    %c0_24 = arith.constant 0 : index
    %c0_25 = arith.constant 0 : index
    %35 = vector.load %arg4[%c0_24, %c0_25] : memref<16x128xf32, #tpu.memory_space<vmem>>, vector<16x128xf32>
    tpu.vector_store %arg4[%c0_24, %c0_25], %34 {strides = array<i32>} : memref<16x128xf32, #tpu.memory_space<vmem>>, vector<16x128xf32>,
    return
  }
  func.func @transform_0(%arg0: i32) -> (i32, i32) {
    %c0_i32 = arith.constant 0 : i32
    %c0_i32_0 = arith.constant 0 : i32
    return %arg0, %c0_i32 : i32, i32
  }
  func.func @transform_1(%arg0: i32) -> (i32, i32, i32) {
    %c0_i32 = arith.constant 0 : i32
    %c0_i32_0 = arith.constant 0 : i32
    %c0_i32_1 = arith.constant 0 : i32
    %c0_i32_2 = arith.constant 0 : i32
    return %c0_i32, %c0_i32_0, %c0_i32_1 : i32, i32, i32
  }
  func.func @transform_2(%arg0: i32) -> (i32, i32) {
    %c0_i32 = arith.constant 0 : i32
    %c0_i32_0 = arith.constant 0 : i32
    %c0_i32_1 = arith.constant 0 : i32
    return %c0_i32, %c0_i32_0 : i32, i32
  }
  func.func @transform_3(%arg0: i32) -> (i32, i32) {
    %c0_i32 = arith.constant 0 : i32
    %c0_i32_0 = arith.constant 0 : i32
    return %arg0, %c0_i32 : i32, i32
  }
}

</mosaic_0001>

<llo_original>
// kernel: mlp_forward.1
$region0: #{mlp_forward.1}
  #allocation0 [shape = 'u32[]', space=smem, size = 0x4, offset = 0x4, fixed_abs, tag = 'smem constant byte address 0x4 - core index']
  #allocation1 [shape = 'u32[144,128]{1,0:T(1,128)}', space=vmem, size = 0x12000, scoped, tag = 'internal scratch']
  %s0 = inlined_call_operand.vmem [shape: bf16[16,32], index: 0, kind: input, shape index: {}]
  %s1 = inlined_call_operand.hbm [shape: bf16[4,128,128], index: 1, kind: input, shape index: {}]
  %s2 = inlined_call_operand.vmem [shape: f32[4,128], index: 2, kind: input, shape index: {}]
  %s3 = inlined_call_operand.vmem [shape: f32[16,128], index: 3, kind: output, shape index: {}]
  %s4 = sld [smem:[#allocation0]]
  $region26: #{mlp_forward.1} parent=0
    _
  %s6 = ssub.s32 1, %s4
  %s7 = scalar_select 0, %s6, %s4
  $region1: #{mlp_forward.1} parent=0
    #allocation2 [shape = 'u8[131072]{0}', space=vmem, size = 0x20000, scoped, tag = 'input window, operand 1, single buffered']
    #allocation3 [shape = 's32[1]{0}', space=sflag, size = 0x4, scoped, tag = 'scoped memory for mlp_forward.1']
    %8 = vsyncpa [#allocation3], 0
    // Predicated region
    $region2: #{mlp_forward.1} parent=1 // pred_check
      _
    $region3: #{mlp_forward.1} parent=1 // pred_check_branch
      %10 = sbr.rel (0) target = $region5
    $region4: #{mlp_forward.1} parent=1 // pred_region
      _
    $region5: #{mlp_forward.1} parent=1 // pred_fallthru
      _
    // Predicated region
    $region6: #{mlp_forward.1} parent=1 // pred_check
      _
    $region7: #{mlp_forward.1} parent=1 // pred_check_branch
      %12 = sbr.rel (0) target = $region9
    $region8: #{mlp_forward.1} parent=1 // pred_region
      %s14 = ssub.s32 4096, 4096
      %15 = vsyncadd [#allocation3], %s14
      %s16 = sshll.u32 [#allocation2], 4
      %s17 = int_to_ptr.vmem [resolvable:$true] %s16
      %22 = dma.hbm_to_vmem [thread:$0]  %s1, 4096, %s17, [#allocation3], 64, 64, 4
    $region9: #{mlp_forward.1} parent=1 // pred_fallthru
      _
    // Predicated region
    $region10: #{mlp_forward.1} parent=1 // pred_check
      _
    $region11: #{mlp_forward.1} parent=1 // pred_check_branch
      %24 = sbr.rel (0) target = $region13
    $region12: #{mlp_forward.1} parent=1 // pred_region
      _
    $region13: #{mlp_forward.1} parent=1 // pred_fallthru
      _
    // Predicated region
    $region14: #{mlp_forward.1} parent=1 // pred_check
      _
    $region15: #{mlp_forward.1} parent=1 // pred_check_branch
      %26 = sbr.rel (0) target = $region17
    $region16: #{mlp_forward.1} parent=1 // pred_region
      %27 = dma.done [#allocation3], 4096
    $region17: #{mlp_forward.1} parent=1 // pred_fallthru
      _
    %v29 = vld [vmem:[%s0] sm:$0xf]
    %v30 = vld [vmem:[%s0 + $0x4] sm:$0xf]
    %v31 = vld [vmem:[#allocation2] sm:$0xf]
    %v32 = vld [vmem:[#allocation2 + $0x4] sm:$0xf]
    %v33 = vld [vmem:[#allocation2 + $0x8] sm:$0xf]
    %v34 = vld [vmem:[#allocation2 + $0xc] sm:$0xf]
    %v35 = vld [vmem:[%s2] sm:$0x1]
    %v36 = vlaneseq
    %v37 = vshrl.u32 %v36, 7
    %v38 = vsub.s32 0, %v37
    %v39 = vrot.slane %v35, %v38
    %v42 = vunpack.c.l.b16 %v29
    %v43 = vunpack.c.l.b16 %v30
    %v44 = vpack.c.b16 %v43, %v42
    %v49 = vunpack.c.l.b16 %v31
    %v50 = vunpack.c.l.b16 %v32
    %v51 = vunpack.c.l.b16 %v33
    %v52 = vunpack.c.l.b16 %v34
    %v53 = vpack.c.b16 %v50, %v49
    %v54 = vpack.c.b16 %v52, %v51
    %vm57 = vcmask 261120
    %v59 = vsel %vm57, %v44, 0
    %61 = vmatprep.subr.bf16.mxu0 0
    %62 = vmatpush1.bf16.msra.mxu0 %v53
    %63 = vmatprep.subr.bf16.mxu0 0
    %64 = vmatpush1.bf16.msra.mxu0 %v54
    %65 = vmatprep.subr.bf16.mxu0 0
    %66 = vmatpush1.bf16.msra.mxu0 0
    %67 = vmatprep.subr.bf16.mxu0 0
    %68 = vmatpush1.bf16.msra.mxu0 0
    %69 = vmatprep.subr.bf16.mxu0 0
    %70 = vmatpush1.bf16.msra.mxu0 0
    %71 = vmatprep.subr.bf16.mxu0 0
    %72 = vmatpush1.bf16.msra.mxu0 0
    %73 = vmatprep.subr.bf16.mxu0 0
    %74 = vmatpush1.bf16.msra.mxu0 0
    %75 = vmatprep.subr.bf16.mxu0 0
    %76 = vmatpush1.bf16.msra.mxu0 0
    %77 = vmatprep.subr.bf16.mxu0 0
    %78 = vmatpush1.bf16.msra.mxu0 0
    %79 = vmatprep.subr.bf16.mxu0 0
    %80 = vmatpush1.bf16.msra.mxu0 0
    %81 = vmatprep.subr.bf16.mxu0 0
    %82 = vmatpush1.bf16.msra.mxu0 0
    %83 = vmatprep.subr.bf16.mxu0 0
    %84 = vmatpush1.bf16.msra.mxu0 0
    %85 = vmatprep.subr.bf16.mxu0 0
    %86 = vmatpush1.bf16.msra.mxu0 0
    %87 = vmatprep.subr.bf16.mxu0 0
    %88 = vmatpush1.bf16.msra.mxu0 0
    %89 = vmatprep.subr.bf16.mxu0 0
    %90 = vmatpush1.bf16.msra.mxu0 0
    %91 = vmatprep.subr.bf16.mxu0 0
    %92 = vmatpush1.bf16.msra.mxu0 0
    %93 = vmatprep.mubr.bf16.mxu0 0
    %94 = vmatmul.mubr.bf16.gmra.mrb[0].mxu0 %v59
    %v95 = vpop.f32.mrb[0].mxu0
    %v96 = vadd.f32 %v39, %v95
    %v97 = vpop.f32.mrb[0].mxu0
    %v98 = vpop.f32.mrb[0].mxu0
    %v99 = vadd.f32 %v39, %v98
    %v100 = vpop.f32.mrb[0].mxu0
    %101 = vdwg.mxu0
    %v102 = vmax.f32 %v96, 0.0
    %v103 = vmax.f32 %v99, 0.0
    %v104 = vpack.c.bf16 %v103, %v102
    %s105 = scalar_lea.vmem [#allocation2], 64
    %v106 = vld [vmem:[%s105] sm:$0xf]
    %v107 = vld [vmem:[%s105 + $0x4] sm:$0xf]
    %v108 = vld [vmem:[%s105 + $0x8] sm:$0xf]
    %v109 = vld [vmem:[%s105 + $0xc] sm:$0xf]
    %v110 = vld [vmem:[%s105 + $0x10] sm:$0xf]
    %v111 = vld [vmem:[%s105 + $0x14] sm:$0xf]
    %v112 = vld [vmem:[%s105 + $0x18] sm:$0xf]
    %v113 = vld [vmem:[%s105 + $0x1c] sm:$0xf]
    %v114 = vld [vmem:[%s105 + $0x20] sm:$0xf]
    %v115 = vld [vmem:[%s105 + $0x24] sm:$0xf]
    %v116 = vld [vmem:[%s105 + $0x28] sm:$0xf]
    %v117 = vld [vmem:[%s105 + $0x2c] sm:$0xf]
    %v118 = vld [vmem:[%s105 + $0x30] sm:$0xf]
    %v119 = vld [vmem:[%s105 + $0x34] sm:$0xf]
    %v120 = vld [vmem:[%s105 + $0x38] sm:$0xf]
    %v121 = vld [vmem:[%s105 + $0x3c] sm:$0xf]
    %v122 = vld [vmem:[%s2 + $0x1] sm:$0x1]
    %v123 = vlaneseq
    %v124 = vshrl.u32 %v123, 7
    %v125 = vsub.s32 0, %v124
    %v126 = vrot.slane %v122, %v125
    %v143 = vunpack.c.l.b16 %v106
    %v144 = vunpack.c.l.b16 %v107
    %v145 = vunpack.c.l.b16 %v108
    %v146 = vunpack.c.l.b16 %v109
    %v147 = vunpack.c.l.b16 %v110
    %v148 = vunpack.c.l.b16 %v111
    %v149 = vunpack.c.l.b16 %v112
    %v150 = vunpack.c.l.b16 %v113
    %v151 = vunpack.c.l.b16 %v114
    %v152 = vunpack.c.l.b16 %v115
    %v153 = vunpack.c.l.b16 %v116
    %v154 = vunpack.c.l.b16 %v117
    %v155 = vunpack.c.l.b16 %v118
    %v156 = vunpack.c.l.b16 %v119
    %v157 = vunpack.c.l.b16 %v120
    %v158 = vunpack.c.l.b16 %v121
    %v159 = vpack.c.b16 %v144, %v143
    %v160 = vpack.c.b16 %v146, %v145
    %v161 = vpack.c.b16 %v148, %v147
    %v162 = vpack.c.b16 %v150, %v149
    %v163 = vpack.c.b16 %v152, %v151
    %v164 = vpack.c.b16 %v154, %v153
    %v165 = vpack.c.b16 %v156, %v155
    %v166 = vpack.c.b16 %v158, %v157
    %175 = vmatprep.subr.bf16.mxu0 0
    %176 = vmatpush1.bf16.msra.mxu0 %v159
    %177 = vmatprep.subr.bf16.mxu0 0
    %178 = vmatpush1.bf16.msra.mxu0 %v160
    %179 = vmatprep.subr.bf16.mxu0 0
    %180 = vmatpush1.bf16.msra.mxu0 %v161
    %181 = vmatprep.subr.bf16.mxu0 0
    %182 = vmatpush1.bf16.msra.mxu0 %v162
    %183 = vmatprep.subr.bf16.mxu0 0
    %184 = vmatpush1.bf16.msra.mxu0 %v163
    %185 = vmatprep.subr.bf16.mxu0 0
    %186 = vmatpush1.bf16.msra.mxu0 %v164
    %187 = vmatprep.subr.bf16.mxu0 0
    %188 = vmatpush1.bf16.msra.mxu0 %v165
    %189 = vmatprep.subr.bf16.mxu0 0
    %190 = vmatpush1.bf16.msra.mxu0 %v166
    %191 = vmatprep.subr.bf16.mxu0 0
    %192 = vmatpush1.bf16.msra.mxu0 0
    %193 = vmatprep.subr.bf16.mxu0 0
    %194 = vmatpush1.bf16.msra.mxu0 0
    %195 = vmatprep.subr.bf16.mxu0 0
    %196 = vmatpush1.bf16.msra.mxu0 0
    %197 = vmatprep.subr.bf16.mxu0 0
    %198 = vmatpush1.bf16.msra.mxu0 0
    %199 = vmatprep.subr.bf16.mxu0 0
    %200 = vmatpush1.bf16.msra.mxu0 0
    %201 = vmatprep.subr.bf16.mxu0 0
    %202 = vmatpush1.bf16.msra.mxu0 0
    %203 = vmatprep.subr.bf16.mxu0 0
    %204 = vmatpush1.bf16.msra.mxu0 0
    %205 = vmatprep.subr.bf16.mxu0 0
    %206 = vmatpush1.bf16.msra.mxu0 0
    %207 = vmatprep.mubr.bf16.mxu0 0
    %208 = vmatmul.mubr.bf16.gmra.mrb[0].mxu0 %v104
    %v209 = vpop.f32.mrb[0].mxu0
    %v210 = vadd.f32 %v126, %v209
    %v211 = vpop.f32.mrb[0].mxu0
    %v212 = vpop.f32.mrb[0].mxu0
    %v213 = vadd.f32 %v126, %v212
    %v214 = vpop.f32.mrb[0].mxu0
    %215 = vdwg.mxu0
    %v216 = vmax.f32 %v210, 0.0
    %v217 = vmax.f32 %v213, 0.0
    %v218 = vpack.c.bf16 %v217, %v216
    %s219 = scalar_lea.vmem [#allocation2], 128
    %v220 = vld [vmem:[%s219] sm:$0xf]
    %v221 = vld [vmem:[%s219 + $0x4] sm:$0xf]
    %v222 = vld [vmem:[%s219 + $0x8] sm:$0xf]
    %v223 = vld [vmem:[%s219 + $0xc] sm:$0xf]
    %v224 = vld [vmem:[%s219 + $0x10] sm:$0xf]
    %v225 = vld [vmem:[%s219 + $0x14] sm:$0xf]
    %v226 = vld [vmem:[%s219 + $0x18] sm:$0xf]
    %v227 = vld [vmem:[%s219 + $0x1c] sm:$0xf]
    %v228 = vld [vmem:[%s219 + $0x20] sm:$0xf]
    %v229 = vld [vmem:[%s219 + $0x24] sm:$0xf]
    %v230 = vld [vmem:[%s219 + $0x28] sm:$0xf]
    %v231 = vld [vmem:[%s219 + $0x2c] sm:$0xf]
    %v232 = vld [vmem:[%s219 + $0x30] sm:$0xf]
    %v233 = vld [vmem:[%s219 + $0x34] sm:$0xf]
    %v234 = vld [vmem:[%s219 + $0x38] sm:$0xf]
    %v235 = vld [vmem:[%s219 + $0x3c] sm:$0xf]
    %v236 = vld [vmem:[%s2 + $0x2] sm:$0x1]
    %v237 = vlaneseq
    %v238 = vshrl.u32 %v237, 7
    %v239 = vsub.s32 0, %v238
    %v240 = vrot.slane %v236, %v239
    %v257 = vunpack.c.l.b16 %v220
    %v258 = vunpack.c.l.b16 %v221
    %v259 = vunpack.c.l.b16 %v222
    %v260 = vunpack.c.l.b16 %v223
    %v261 = vunpack.c.l.b16 %v224
    %v262 = vunpack.c.l.b16 %v225
    %v263 = vunpack.c.l.b16 %v226
    %v264 = vunpack.c.l.b16 %v227
    %v265 = vunpack.c.l.b16 %v228
    %v266 = vunpack.c.l.b16 %v229
    %v267 = vunpack.c.l.b16 %v230
    %v268 = vunpack.c.l.b16 %v231
    %v269 = vunpack.c.l.b16 %v232
    %v270 = vunpack.c.l.b16 %v233
    %v271 = vunpack.c.l.b16 %v234
    %v272 = vunpack.c.l.b16 %v235
    %v273 = vpack.c.b16 %v258, %v257
    %v274 = vpack.c.b16 %v260, %v259
    %v275 = vpack.c.b16 %v262, %v261
    %v276 = vpack.c.b16 %v264, %v263
    %v277 = vpack.c.b16 %v266, %v265
    %v278 = vpack.c.b16 %v268, %v267
    %v279 = vpack.c.b16 %v270, %v269
    %v280 = vpack.c.b16 %v272, %v271
    %289 = vmatprep.subr.bf16.mxu0 0
    %290 = vmatpush1.bf16.msra.mxu0 %v273
    %291 = vmatprep.subr.bf16.mxu0 0
    %292 = vmatpush1.bf16.msra.mxu0 %v274
    %293 = vmatprep.subr.bf16.mxu0 0
    %294 = vmatpush1.bf16.msra.mxu0 %v275
    %295 = vmatprep.subr.bf16.mxu0 0
    %296 = vmatpush1.bf16.msra.mxu0 %v276
    %297 = vmatprep.subr.bf16.mxu0 0
    %298 = vmatpush1.bf16.msra.mxu0 %v277
    %299 = vmatprep.subr.bf16.mxu0 0
    %300 = vmatpush1.bf16.msra.mxu0 %v278
    %301 = vmatprep.subr.bf16.mxu0 0
    %302 = vmatpush1.bf16.msra.mxu0 %v279
    %303 = vmatprep.subr.bf16.mxu0 0
    %304 = vmatpush1.bf16.msra.mxu0 %v280
    %305 = vmatprep.subr.bf16.mxu0 0
    %306 = vmatpush1.bf16.msra.mxu0 0
    %307 = vmatprep.subr.bf16.mxu0 0
    %308 = vmatpush1.bf16.msra.mxu0 0
    %309 = vmatprep.subr.bf16.mxu0 0
    %310 = vmatpush1.bf16.msra.mxu0 0
    %311 = vmatprep.subr.bf16.mxu0 0
    %312 = vmatpush1.bf16.msra.mxu0 0
    %313 = vmatprep.subr.bf16.mxu0 0
    %314 = vmatpush1.bf16.msra.mxu0 0
    %315 = vmatprep.subr.bf16.mxu0 0
    %316 = vmatpush1.bf16.msra.mxu0 0
    %317 = vmatprep.subr.bf16.mxu0 0
    %318 = vmatpush1.bf16.msra.mxu0 0
    %319 = vmatprep.subr.bf16.mxu0 0
    %320 = vmatpush1.bf16.msra.mxu0 0
    %321 = vmatprep.mubr.bf16.mxu0 0
    %322 = vmatmul.mubr.bf16.gmra.mrb[0].mxu0 %v218
    %v323 = vpop.f32.mrb[0].mxu0
    %v324 = vadd.f32 %v240, %v323
    %v325 = vpop.f32.mrb[0].mxu0
    %v326 = vpop.f32.mrb[0].mxu0
    %v327 = vadd.f32 %v240, %v326
    %v328 = vpop.f32.mrb[0].mxu0
    %329 = vdwg.mxu0
    %v330 = vmax.f32 %v324, 0.0
    %v331 = vmax.f32 %v327, 0.0
    %v332 = vpack.c.bf16 %v331, %v330
    %s333 = scalar_lea.vmem [#allocation2], 192
    %v334 = vld [vmem:[%s333] sm:$0xf]
    %v335 = vld [vmem:[%s333 + $0x4] sm:$0xf]
    %v336 = vld [vmem:[%s333 + $0x8] sm:$0xf]
    %v337 = vld [vmem:[%s333 + $0xc] sm:$0xf]
    %v338 = vld [vmem:[%s333 + $0x10] sm:$0xf]
    %v339 = vld [vmem:[%s333 + $0x14] sm:$0xf]
    %v340 = vld [vmem:[%s333 + $0x18] sm:$0xf]
    %v341 = vld [vmem:[%s333 + $0x1c] sm:$0xf]
    %v342 = vld [vmem:[%s333 + $0x20] sm:$0xf]
    %v343 = vld [vmem:[%s333 + $0x24] sm:$0xf]
    %v344 = vld [vmem:[%s333 + $0x28] sm:$0xf]
    %v345 = vld [vmem:[%s333 + $0x2c] sm:$0xf]
    %v346 = vld [vmem:[%s333 + $0x30] sm:$0xf]
    %v347 = vld [vmem:[%s333 + $0x34] sm:$0xf]
    %v348 = vld [vmem:[%s333 + $0x38] sm:$0xf]
    %v349 = vld [vmem:[%s333 + $0x3c] sm:$0xf]
    %v350 = vld [vmem:[%s2 + $0x3] sm:$0x1]
    %v351 = vlaneseq
    %v352 = vshrl.u32 %v351, 7
    %v353 = vsub.s32 0, %v352
    %v354 = vrot.slane %v350, %v353
    %v371 = vunpack.c.l.b16 %v334
    %v372 = vunpack.c.l.b16 %v335
    %v373 = vunpack.c.l.b16 %v336
    %v374 = vunpack.c.l.b16 %v337
    %v375 = vunpack.c.l.b16 %v338
    %v376 = vunpack.c.l.b16 %v339
    %v377 = vunpack.c.l.b16 %v340
    %v378 = vunpack.c.l.b16 %v341
    %v379 = vunpack.c.l.b16 %v342
    %v380 = vunpack.c.l.b16 %v343
    %v381 = vunpack.c.l.b16 %v344
    %v382 = vunpack.c.l.b16 %v345
    %v383 = vunpack.c.l.b16 %v346
    %v384 = vunpack.c.l.b16 %v347
    %v385 = vunpack.c.l.b16 %v348
    %v386 = vunpack.c.l.b16 %v349
    %v387 = vpack.c.b16 %v372, %v371
    %v388 = vpack.c.b16 %v374, %v373
    %v389 = vpack.c.b16 %v376, %v375
    %v390 = vpack.c.b16 %v378, %v377
    %v391 = vpack.c.b16 %v380, %v379
    %v392 = vpack.c.b16 %v382, %v381
    %v393 = vpack.c.b16 %v384, %v383
    %v394 = vpack.c.b16 %v386, %v385
    %403 = vmatprep.subr.bf16.mxu0 0
    %404 = vmatpush1.bf16.msra.mxu0 %v387
    %405 = vmatprep.subr.bf16.mxu0 0
    %406 = vmatpush1.bf16.msra.mxu0 %v388
    %407 = vmatprep.subr.bf16.mxu0 0
    %408 = vmatpush1.bf16.msra.mxu0 %v389
    %409 = vmatprep.subr.bf16.mxu0 0
    %410 = vmatpush1.bf16.msra.mxu0 %v390
    %411 = vmatprep.subr.bf16.mxu0 0
    %412 = vmatpush1.bf16.msra.mxu0 %v391
    %413 = vmatprep.subr.bf16.mxu0 0
    %414 = vmatpush1.bf16.msra.mxu0 %v392
    %415 = vmatprep.subr.bf16.mxu0 0
    %416 = vmatpush1.bf16.msra.mxu0 %v393
    %417 = vmatprep.subr.bf16.mxu0 0
    %418 = vmatpush1.bf16.msra.mxu0 %v394
    %419 = vmatprep.subr.bf16.mxu0 0
    %420 = vmatpush1.bf16.msra.mxu0 0
    %421 = vmatprep.subr.bf16.mxu0 0
    %422 = vmatpush1.bf16.msra.mxu0 0
    %423 = vmatprep.subr.bf16.mxu0 0
    %424 = vmatpush1.bf16.msra.mxu0 0
    %425 = vmatprep.subr.bf16.mxu0 0
    %426 = vmatpush1.bf16.msra.mxu0 0
    %427 = vmatprep.subr.bf16.mxu0 0
    %428 = vmatpush1.bf16.msra.mxu0 0
    %429 = vmatprep.subr.bf16.mxu0 0
    %430 = vmatpush1.bf16.msra.mxu0 0
    %431 = vmatprep.subr.bf16.mxu0 0
    %432 = vmatpush1.bf16.msra.mxu0 0
    %433 = vmatprep.subr.bf16.mxu0 0
    %434 = vmatpush1.bf16.msra.mxu0 0
    %435 = vmatprep.mubr.bf16.mxu0 0
    %436 = vmatmul.mubr.bf16.gmra.mrb[0].mxu0 %v332
    %v437 = vpop.f32.mrb[0].mxu0
    %v438 = vadd.f32 %v354, %v437
    %v439 = vpop.f32.mrb[0].mxu0
    %v440 = vpop.f32.mrb[0].mxu0
    %v441 = vadd.f32 %v354, %v440
    %v442 = vpop.f32.mrb[0].mxu0
    %443 = vdwg.mxu0
    %444 = vst [vmem:[%s3] sm:$0xff] %v438
    %445 = vst [vmem:[%s3 + $0x8] sm:$0xff] %v441
    // Predicated region
    $region18: #{mlp_forward.1} parent=1 // pred_check
      _
    $region19: #{mlp_forward.1} parent=1 // pred_check_branch
      %447 = sbr.rel (0) target = $region21
    $region20: #{mlp_forward.1} parent=1 // pred_region
      _
    $region21: #{mlp_forward.1} parent=1 // pred_fallthru
      _
    // Predicated region
    $region22: #{mlp_forward.1} parent=1 // pred_check
      _
    $region23: #{mlp_forward.1} parent=1 // pred_check_branch
      %449 = sbr.rel (0) target = $region25
    $region24: #{mlp_forward.1} parent=1 // pred_region
      _
    $region25: #{mlp_forward.1} parent=1 // pred_fallthru
      _
    %450 = vsyncpa [#allocation3], 1

</llo_original>
